<compile_context>
chip_gen: v5e
topology: v5e:2x2
jax: 0.10.0
libtpu: 0.0.40
codegen_flags: <defaults>
</compile_context>

<pallas_src>
import math

import jax
import jax.numpy as jnp
from jax import lax
from jax.experimental import pallas as pl
from jax.experimental.pallas import tpu as pltpu

LANES = 128  # TPU lane width; we pack (128 // hidden) logical rows per physical row.


def _make_compute(packed_blocks, num_packed_rows):
    """Shared kernel math on a 2-D (P,128) slab."""
    P = num_packed_rows

    def compute(t, y, w_ref, b_ref):
        # y: (P,128) f32 ; w_ref: (128, C*128) bf16 ; b_ref: (C,1,128) f32
        # One MXU pass over the whole flat state: N = C*128 fills the wide MXU
        # on v6e/v7x; on v5e it is simply C sequential 128-wide pushes.
        z = jnp.dot(y.astype(jnp.bfloat16), w_ref[...],
                    preferred_element_type=jnp.float32)          # (P, C*128) f32
        row = lax.broadcasted_iota(jnp.int32, (P, LANES), 0)
        out = jnp.zeros((P, LANES), jnp.float32)
        for c, (off, rows) in enumerate(packed_blocks):          # static unroll
            zc = z[:, c * LANES:(c + 1) * LANES]                 # 128-aligned lane slice
            fc = jnp.tanh(zc + t * b_ref[c])                     # f32 epilogue, EUP tanh
            sel = (row >= off) & (row < off + rows)              # disjoint row masks
            out = jnp.where(sel, fc, out)
        return out

    return compute


def _make_single_kernel(packed_blocks, P):
    compute = _make_compute(packed_blocks, P)

    def kernel(t_ref, y_ref, w_ref, b_ref, out_ref):
        out_ref[...] = compute(t_ref[0, 0], y_ref[...], w_ref, b_ref)

    return kernel


def _make_batched_kernel(packed_blocks, P):
    compute = _make_compute(packed_blocks, P)

    def kernel(t_ref, y_ref, w_ref, b_ref, out_ref):
        out_ref[0] = compute(t_ref[0, 0], y_ref[0], w_ref, b_ref)

    return kernel


class TupleFuncPallas:
    """Fused `_TupleFunc` forward: one pallas_call per RHS evaluation
    (optionally over a batch of independent flat states via a parallel grid)."""

    def __init__(self, shapes, params):
        self.shapes = [tuple(s) for s in shapes]
        hidden = self.shapes[0][-1]
        assert all(s[-1] == hidden for s in self.shapes), \
            "synthetic base_func assumes a shared trailing hidden dim"
        assert LANES % hidden == 0, "hidden must divide 128 for lane packing"
        pack = LANES // hidden

        sizes = [math.prod(s) for s in self.shapes]              # purely static ints
        assert all(n % LANES == 0 for n in sizes), \
            "each component's flat size must be a multiple of 128"
        # TODO(synk): components whose flat size is not a multiple of 128 (e.g. a
        # per-sample log-density scalar in a real CNF state) need a padded/masked
        # packing path.

        packed_rows = [n // LANES for n in sizes]
        offs, tot = [], 0
        for r in packed_rows:
            offs.append(tot)
            tot += r
        self._packed_blocks = list(zip(offs, packed_rows))
        self._P = tot
        self._total = sum(sizes)
        self._C = len(params)
        self._hidden = hidden

        # Pack parameters once at init (outside the hot path):
        #   W_i (h,h) -> block-diag of `pack` copies -> (128,128); all components
        #   concatenated along N -> (128, C*128), stored bf16 (halves per-call
        #   weight DMA; MXU consumes bf16 natively with f32 accumulation).
        #   b_i (1,h) -> tiled `pack` times -> (1,128), kept f32 for the epilogue.
        eye = jnp.eye(pack, dtype=jnp.float32)
        w_blocks = [jnp.kron(eye, w.astype(jnp.float32)) for w, _ in params]
        self._w_cat = jnp.concatenate(w_blocks, axis=1).astype(jnp.bfloat16)  # (128, C*128)
        self._b_stack = jnp.stack(
            [jnp.tile(b.reshape(1, hidden).astype(jnp.float32), (1, pack))
             for _, b in params])                                             # (C,1,128)
        # TODO(synk): shipping compact (C,h,h) weights and expanding the block
        # diagonal in-kernel would cut weight DMA further (~4-8 KiB vs 64 KiB);
        # skipped here to keep the Mosaic lowering simple.

        self._calls = {}

    def _get_call(self, B):
        if B in self._calls:
            return self._calls[B]
        P, C = self._P, self._C
        if B == 1:
            # Grid-less call: plain whole-array VMEM/SMEM specs, no pipelining /
            # double-buffer machinery for a one-shot invocation.
            call = pl.pallas_call(
                _make_single_kernel(self._packed_blocks, P),
                out_shape=jax.ShapeDtypeStruct((P, LANES), jnp.float32),
                in_specs=[
                    pl.BlockSpec(memory_space=pltpu.SMEM),   # t (1,1)
                    pl.BlockSpec(memory_space=pltpu.VMEM),   # y (P,128)
                    pl.BlockSpec(memory_space=pltpu.VMEM),   # W (128,C*128) bf16
                    pl.BlockSpec(memory_space=pltpu.VMEM),   # b (C,1,128) f32
                ],
                out_specs=pl.BlockSpec(memory_space=pltpu.VMEM),
            )
        else:
            # Batch of independent states: parallel grid axis -> both TensorCores
            # on v7x; weights/bias use a constant block index so they are DMA'd
            # once and stay resident across all batch steps.
            call = pl.pallas_call(
                _make_batched_kernel(self._packed_blocks, P),
                out_shape=jax.ShapeDtypeStruct((B, P, LANES), jnp.float32),
                grid=(B,),
                in_specs=[
                    pl.BlockSpec(memory_space=pltpu.SMEM),              # t
                    pl.BlockSpec((1, P, LANES), lambda b: (b, 0, 0)),   # y
                    pl.BlockSpec((LANES, C * LANES), lambda b: (0, 0)),  # W (resident)
                    pl.BlockSpec((C, 1, LANES), lambda b: (0, 0, 0)),    # b (resident)
                ],
                out_specs=pl.BlockSpec((1, P, LANES), lambda b: (b, 0, 0)),
                compiler_params=pltpu.CompilerParams(
                    dimension_semantics=("parallel",)),
            )
        self._calls[B] = call
        return call

    def __call__(self, t, y_flat):
        # TODO(synk): fusing all RK stages of an ODE step into one pallas_call
        # (stage coefficients via SMEM, intermediate y's in VMEM scratch) would
        # amortize dispatch further, but the integrator is not part of this spec.
        t_arr = jnp.asarray(t, jnp.float32).reshape(1, 1)
        if y_flat.ndim == 1:
            y = y_flat.reshape(self._P, LANES)                   # free bitcast reshape
            out = self._get_call(1)(t_arr, y, self._w_cat, self._b_stack)
            return out.reshape(-1)                               # == torch.cat of flats
        B = y_flat.shape[0]
        y = y_flat.reshape(B, self._P, LANES)
        out = self._get_call(B)(t_arr, y, self._w_cat, self._b_stack)
        return out.reshape(B, -1)


if __name__ == "__main__":
    key = jax.random.PRNGKey(0)

    # tuple-of-tensors state (as in the CNF setup); last dim = hidden = 32
    shapes = [(4, 8, 32), (16, 32)]
    hidden = 32
    total = sum(math.prod(s) for s in shapes)                    # 1024 + 512 = 1536

    k_y, k_yb, k_w1, k_b1, k_w2, k_b2 = jax.random.split(key, 6)
    y_flat = jax.random.normal(k_y, (total,), dtype=jnp.float32)
    y_batch = jax.random.normal(k_yb, (8, total), dtype=jnp.float32)
    params = [
        (0.1 * jax.random.normal(k_w1, (hidden, hidden), jnp.float32),
         0.1 * jax.random.normal(k_b1, (1, hidden), jnp.float32)),
        (0.1 * jax.random.normal(k_w2, (hidden, hidden), jnp.float32),
         0.1 * jax.random.normal(k_b2, (1, hidden), jnp.float32)),
    ]
    t = jnp.float32(0.5)

    func = TupleFuncPallas(shapes, params)
    fwd = jax.jit(lambda tt, yy: func(tt, yy))   # one fused program per RHS evaluation

    # pure-JAX reference (mirrors _flat_to_shape -> base_func -> cat), f32
    def ref_fn(tt, yy):
        parts, off = [], 0
        for shape, (w, b) in zip(shapes, params):
            n = math.prod(shape)
            y_i = yy[off:off + n].reshape(-1, hidden)
            off += n
            parts.append(jnp.tanh(y_i @ w + tt * b).reshape(-1))
        return jnp.concatenate(parts)

    # --- single flat state (exact _TupleFunc signature) ---
    out = jax.block_until_ready(fwd(t, y_flat))
    assert out.shape == (total,), out.shape
    ref = ref_fn(t, y_flat)
    # bf16 weights/activations on the MXU -> loosened tolerance (f32 epilogue).
    assert jnp.allclose(out, ref, atol=5e-2, rtol=0.0), \
        float(jnp.max(jnp.abs(out - ref)))

    # --- batched states (dispatch amortization; parallel grid -> v7x dual-TC) ---
    out_b = jax.block_until_ready(fwd(t, y_batch))
    assert out_b.shape == (8, total), out_b.shape
    ref_b = jnp.stack([ref_fn(t, y_batch[i]) for i in range(y_batch.shape[0])])
    assert jnp.allclose(out_b, ref_b, atol=5e-2, rtol=0.0), \
        float(jnp.max(jnp.abs(out_b - ref_b)))

    print("KERNEL_OK")
</pallas_src>

<mosaic_0001>
module attributes {stable_mosaic.version = 11 : i64} {
  func.func @kernel(%arg0: memref<1x1xf32, #tpu.memory_space<smem>>, %arg1: memref<12x128xf32, #tpu.memory_space<vmem>>, %arg2: memref<128x256xbf16, #tpu.memory_space<vmem>>, %arg3: memref<2x1x128xf32, #tpu.memory_space<vmem>>, %arg4: memref<12x128xf32, #tpu.memory_space<vmem>>) attributes {dimension_semantics = [], scalar_prefetch = 0 : i64, scratch_operands = 0 : i64, tpu.core_type = #tpu.core_type<tc>} {
    %c0 = arith.constant 0 : index
    %c0_0 = arith.constant 0 : index
    %0 = memref.load %arg0[%c0, %c0_0] : memref<1x1xf32, #tpu.memory_space<smem>>
    %c0_1 = arith.constant 0 : index
    %c0_2 = arith.constant 0 : index
    %1 = vector.load %arg1[%c0_1, %c0_2] : memref<12x128xf32, #tpu.memory_space<vmem>>, vector<12x128xf32>
    %2 = arith.truncf %1 : vector<12x128xf32> to vector<12x128xbf16>
    %c0_3 = arith.constant 0 : index
    %c0_4 = arith.constant 0 : index
    %3 = vector.load %arg2[%c0_3, %c0_4] : memref<128x256xbf16, #tpu.memory_space<vmem>>, vector<128x256xbf16>
    %cst = arith.constant dense<0.000000e+00> : vector<12x256xf32>
    %4 = tpu.matmul %2, %3, %cst {dimension_numbers = #tpu.dot_dimension_numbers<[1], [0], [0], [1], [0, 0, 1, 1], [], []>} : vector<12x128xbf16>, vector<128x256xbf16>, vector<12x256xf32> -> vector<12x256xf32>
    %5 = tpu.iota {dimensions = array<i32: 0>} : vector<12x128xi32>
    %cst_5 = arith.constant 0.000000e+00 : f32
    %6 = vector.broadcast %cst_5 : f32 to vector<12x128xf32>
    %7 = vector.extract_strided_slice %4 {offsets = [0, 0], sizes = [12, 128], strides = [1, 1]} : vector<12x256xf32> to vector<12x128xf32>
    %c0_6 = arith.constant 0 : index
    %c0_7 = arith.constant 0 : index
    %c0_8 = arith.constant 0 : index
    %8 = vector.load %arg3[%c0_6, %c0_7, %c0_8] : memref<2x1x128xf32, #tpu.memory_space<vmem>>, vector<1x1x128xf32>
    %9 = vector.shape_cast %8 : vector<1x1x128xf32> to vector<1x128xf32>
    %10 = vector.broadcast %0 : f32 to vector<1x128xf32>
    %11 = arith.mulf %10, %9 : vector<1x128xf32>
    %12 = vector.broadcast %11 : vector<1x128xf32> to vector<12x128xf32>
    %13 = arith.addf %7, %12 : vector<12x128xf32>
    %14 = math.tanh %13 : vector<12x128xf32>
    %c0_i32 = arith.constant 0 : i32
    %15 = vector.broadcast %c0_i32 : i32 to vector<12x128xi32>
    %16 = arith.cmpi sge, %5, %15 : vector<12x128xi32>
    %c8_i32 = arith.constant 8 : i32
    %17 = vector.broadcast %c8_i32 : i32 to vector<12x128xi32>
    %18 = arith.cmpi slt, %5, %17 : vector<12x128xi32>
    %19 = arith.andi %16, %18 : vector<12x128xi1>
    %20 = arith.select %19, %14, %6 : vector<12x128xi1>, vector<12x128xf32>
    %21 = vector.extract_strided_slice %4 {offsets = [0, 128], sizes = [12, 128], strides = [1, 1]} : vector<12x256xf32> to vector<12x128xf32>
    %c1 = arith.constant 1 : index
    %c0_9 = arith.constant 0 : index
    %c0_10 = arith.constant 0 : index
    %22 = vector.load %arg3[%c1, %c0_9, %c0_10] : memref<2x1x128xf32, #tpu.memory_space<vmem>>, vector<1x1x128xf32>
    %23 = vector.shape_cast %22 : vector<1x1x128xf32> to vector<1x128xf32>
    %24 = vector.broadcast %0 : f32 to vector<1x128xf32>
    %25 = arith.mulf %24, %23 : vector<1x128xf32>
    %26 = vector.broadcast %25 : vector<1x128xf32> to vector<12x128xf32>
    %27 = arith.addf %21, %26 : vector<12x128xf32>
    %28 = math.tanh %27 : vector<12x128xf32>
    %c8_i32_11 = arith.constant 8 : i32
    %29 = vector.broadcast %c8_i32_11 : i32 to vector<12x128xi32>
    %30 = arith.cmpi sge, %5, %29 : vector<12x128xi32>
    %c12_i32 = arith.constant 12 : i32
    %31 = vector.broadcast %c12_i32 : i32 to vector<12x128xi32>
    %32 = arith.cmpi slt, %5, %31 : vector<12x128xi32>
    %33 = arith.andi %30, %32 : vector<12x128xi1>
    %34 = arith.select %33, %28, %20 : vector<12x128xi1>, vector<12x128xf32>
    %c0_12 = arith.constant 0 : index
    %c0_13 = arith.constant 0 : index
    %35 = vector.load %arg4[%c0_12, %c0_13] : memref<12x128xf32, #tpu.memory_space<vmem>>, vector<12x128xf32>
    tpu.vector_store %arg4[%c0_12, %c0_13], %34 {strides = array<i32>} : memref<12x128xf32, #tpu.memory_space<vmem>>, vector<12x128xf32>,
    return
  }
}

</mosaic_0001>

<llo_original>
// kernel: _lambda_.1
$region0: #{_lambda_.1}
  #allocation0 [shape = 'u32[]', space=smem, size = 0x4, offset = 0x4, fixed_abs, tag = 'smem constant byte address 0x4 - core index']
  #allocation1 [shape = 'u32[72,128]{1,0:T(1,128)}', space=vmem, size = 0x9000, scoped, tag = 'internal scratch']
  #allocation2 [shape = 'f32[1,1]{1,0:T(1,128)S(6)}', space=smem, size = 0x200, scoped, tag = 'scoped memory for _lambda_.1']
  %s0 = inlined_call_operand.<no memory space> [shape: f32[1,1], index: 0, kind: input, shape index: {}]
  %s1 = inlined_call_operand.hbm [shape: f32[12,128], index: 1, kind: input, shape index: {}]
  %s2 = inlined_call_operand.hbm [shape: bf16[128,256], index: 2, kind: input, shape index: {}]
  %s3 = inlined_call_operand.vmem [shape: f32[2,1,128], index: 3, kind: input, shape index: {}]
  %s4 = inlined_call_operand.hbm [shape: f32[12,128], index: 4, kind: output, shape index: {}]
  %s5 = sld [smem:[#allocation0]]
  $region34: #{_lambda_.1} parent=0
    _
  %s7 = ssub.s32 1, %s5
  %s8 = scalar_select 0, %s7, %s5
  %9 = sst [smem:[#allocation2]] %s0
  $region1: #{_lambda_.1} parent=0
    #allocation3 [shape = 'u8[8192]{0}', space=vmem, size = 0x2000, scoped, tag = 'input window, operand 1, single buffered']
    #allocation4 [shape = 's32[1]{0}', space=sflag, size = 0x4, scoped, tag = 'scoped memory for _lambda_.1']
    #allocation5 [shape = 's32[1]{0}', space=sflag, size = 0x4, scoped, tag = 'scoped memory for _lambda_.1']
    #allocation6 [shape = 'u8[65536]{0}', space=vmem, size = 0x10000, scoped, tag = 'input window, operand 2, single buffered']
    #allocation7 [shape = 's32[1]{0}', space=sflag, size = 0x4, scoped, tag = 'scoped memory for _lambda_.1']
    #allocation8 [shape = 'u8[8192]{0}', space=vmem, size = 0x2000, scoped, tag = 'output window, operand 0, single buffered']
    %10 = vsyncpa [#allocation4], 0
    %11 = vsyncpa [#allocation7], 0
    %12 = vsyncpa [#allocation5], 0
    // Predicated region
    $region2: #{_lambda_.1} parent=1 // pred_check
      _
    $region3: #{_lambda_.1} parent=1 // pred_check_branch
      %14 = sbr.rel (0) target = $region5
    $region4: #{_lambda_.1} parent=1 // pred_region
      _
    $region5: #{_lambda_.1} parent=1 // pred_fallthru
      _
    // Predicated region
    $region6: #{_lambda_.1} parent=1 // pred_check
      _
    $region7: #{_lambda_.1} parent=1 // pred_check_branch
      %16 = sbr.rel (0) target = $region9
    $region8: #{_lambda_.1} parent=1 // pred_region
      %18 = vsyncadd [#allocation4], 0
      %s19 = sshll.u32 %s1, 4
      %s20 = int_to_ptr.hbm [resolvable:$true] %s19
      %s21 = sshll.u32 [#allocation3], 4
      %s22 = int_to_ptr.vmem [resolvable:$true] %s21
      %27 = dma.hbm_to_vmem [thread:$0]  %s20, 256, %s22, [#allocation4], 128, 128, 8
    $region9: #{_lambda_.1} parent=1 // pred_fallthru
      _
    // Predicated region
    $region10: #{_lambda_.1} parent=1 // pred_check
      _
    $region11: #{_lambda_.1} parent=1 // pred_check_branch
      %29 = sbr.rel (0) target = $region13
    $region12: #{_lambda_.1} parent=1 // pred_region
      %31 = vsyncadd [#allocation7], 0
      %s32 = sshll.u32 %s2, 4
      %s33 = int_to_ptr.hbm [resolvable:$true] %s32
      %s34 = sshll.u32 [#allocation6], 4
      %s35 = int_to_ptr.vmem [resolvable:$true] %s34
      %40 = dma.hbm_to_vmem [thread:$0]  %s33, 2048, %s35, [#allocation7], 128, 128, 8
    $region13: #{_lambda_.1} parent=1 // pred_fallthru
      _
    // Predicated region
    $region14: #{_lambda_.1} parent=1 // pred_check
      _
    $region15: #{_lambda_.1} parent=1 // pred_check_branch
      %42 = sbr.rel (0) target = $region17
    $region16: #{_lambda_.1} parent=1 // pred_region
      _
    $region17: #{_lambda_.1} parent=1 // pred_fallthru
      _
    // Predicated region
    $region18: #{_lambda_.1} parent=1 // pred_check
      _
    $region19: #{_lambda_.1} parent=1 // pred_check_branch
      %44 = sbr.rel (0) target = $region21
    $region20: #{_lambda_.1} parent=1 // pred_region
      %46 = dma.done [#allocation4], 256
    $region21: #{_lambda_.1} parent=1 // pred_fallthru
      _
    // Predicated region
    $region22: #{_lambda_.1} parent=1 // pred_check
      _
    $region23: #{_lambda_.1} parent=1 // pred_check_branch
      %48 = sbr.rel (0) target = $region25
    $region24: #{_lambda_.1} parent=1 // pred_region
      %50 = dma.done [#allocation7], 2048
    $region25: #{_lambda_.1} parent=1 // pred_fallthru
      _
    %s51 = sld [smem:[#allocation2]]
    %v52 = vld [vmem:[#allocation3] sm:$0xff]
    %v53 = vld [vmem:[#allocation3 + $0x8] sm:$0xf]
    %v54 = vpack.c.bf16 %v53, %v52
    %v55 = vld [vmem:[#allocation6] sm:$0xff]
    %v56 = vld [vmem:[#allocation6 + $0x8] sm:$0xff]
    %v57 = vld [vmem:[#allocation6 + $0x10] sm:$0xff]
    %v58 = vld [vmem:[#allocation6 + $0x18] sm:$0xff]
    %v59 = vld [vmem:[#allocation6 + $0x20] sm:$0xff]
    %v60 = vld [vmem:[#allocation6 + $0x28] sm:$0xff]
    %v61 = vld [vmem:[#allocation6 + $0x30] sm:$0xff]
    %v62 = vld [vmem:[#allocation6 + $0x38] sm:$0xff]
    %v63 = vld [vmem:[#allocation6 + $0x40] sm:$0xff]
    %v64 = vld [vmem:[#allocation6 + $0x48] sm:$0xff]
    %v65 = vld [vmem:[#allocation6 + $0x50] sm:$0xff]
    %v66 = vld [vmem:[#allocation6 + $0x58] sm:$0xff]
    %v67 = vld [vmem:[#allocation6 + $0x60] sm:$0xff]
    %v68 = vld [vmem:[#allocation6 + $0x68] sm:$0xff]
    %v69 = vld [vmem:[#allocation6 + $0x70] sm:$0xff]
    %v70 = vld [vmem:[#allocation6 + $0x78] sm:$0xff]
    %v87 = vunpack.c.l.b16 %v55
    %v88 = vunpack.c.h.b16 %v55
    %v89 = vunpack.c.l.b16 %v56
    %v90 = vunpack.c.h.b16 %v56
    %v91 = vunpack.c.l.b16 %v57
    %v92 = vunpack.c.h.b16 %v57
    %v93 = vunpack.c.l.b16 %v58
    %v94 = vunpack.c.h.b16 %v58
    %v95 = vunpack.c.l.b16 %v59
    %v96 = vunpack.c.h.b16 %v59
    %v97 = vunpack.c.l.b16 %v60
    %v98 = vunpack.c.h.b16 %v60
    %v99 = vunpack.c.l.b16 %v61
    %v100 = vunpack.c.h.b16 %v61
    %v101 = vunpack.c.l.b16 %v62
    %v102 = vunpack.c.h.b16 %v62
    %v103 = vunpack.c.l.b16 %v63
    %v104 = vunpack.c.h.b16 %v63
    %v105 = vunpack.c.l.b16 %v64
    %v106 = vunpack.c.h.b16 %v64
    %v107 = vunpack.c.l.b16 %v65
    %v108 = vunpack.c.h.b16 %v65
    %v109 = vunpack.c.l.b16 %v66
    %v110 = vunpack.c.h.b16 %v66
    %v111 = vunpack.c.l.b16 %v67
    %v112 = vunpack.c.h.b16 %v67
    %v113 = vunpack.c.l.b16 %v68
    %v114 = vunpack.c.h.b16 %v68
    %v115 = vunpack.c.l.b16 %v69
    %v116 = vunpack.c.h.b16 %v69
    %v117 = vunpack.c.l.b16 %v70
    %v118 = vunpack.c.h.b16 %v70
    %v119 = vpack.c.b16 %v89, %v87
    %v120 = vpack.c.b16 %v90, %v88
    %v121 = vpack.c.b16 %v93, %v91
    %v122 = vpack.c.b16 %v94, %v92
    %v123 = vpack.c.b16 %v97, %v95
    %v124 = vpack.c.b16 %v98, %v96
    %v125 = vpack.c.b16 %v101, %v99
    %v126 = vpack.c.b16 %v102, %v100
    %v127 = vpack.c.b16 %v105, %v103
    %v128 = vpack.c.b16 %v106, %v104
    %v129 = vpack.c.b16 %v109, %v107
    %v130 = vpack.c.b16 %v110, %v108
    %v131 = vpack.c.b16 %v113, %v111
    %v132 = vpack.c.b16 %v114, %v112
    %v133 = vpack.c.b16 %v117, %v115
    %v134 = vpack.c.b16 %v118, %v116
    %151 = vmatpush.bf16.msra.mxu0 %v133
    %152 = vmatpush.bf16.msra.mxu0 %v131
    %153 = vmatpush.bf16.msra.mxu0 %v129
    %154 = vmatpush.bf16.msra.mxu0 %v127
    %155 = vmatpush.bf16.msra.mxu0 %v125
    %156 = vmatpush.bf16.msra.mxu0 %v123
    %157 = vmatpush.bf16.msra.mxu0 %v121
    %158 = vmatpush.bf16.msra.mxu0 %v119
    %159 = vmatmul.bf16.gmra.mxu0 %v54
    %v160 = vpop.f32.mrf.mxu0
    %v161 = vadd.f32 0.0, %v160
    %v162 = vpop.f32.mrf.mxu0
    %v163 = vadd.f32 0.0, %v162
    %164 = vdwg.mxu0
    %165 = vmatpush.bf16.msra.mxu0 %v134
    %166 = vmatpush.bf16.msra.mxu0 %v132
    %167 = vmatpush.bf16.msra.mxu0 %v130
    %168 = vmatpush.bf16.msra.mxu0 %v128
    %169 = vmatpush.bf16.msra.mxu0 %v126
    %170 = vmatpush.bf16.msra.mxu0 %v124
    %171 = vmatpush.bf16.msra.mxu0 %v122
    %172 = vmatpush.bf16.msra.mxu0 %v120
    %173 = vmatmul.bf16.gmra.mxu0 %v54
    %v174 = vpop.f32.mrf.mxu0
    %v175 = vadd.f32 0.0, %v174
    %v176 = vpop.f32.mrf.mxu0
    %v177 = vadd.f32 0.0, %v176
    %178 = vdwg.mxu0
    %v179 = vlaneseq
    %v180 = vshrl.u32 %v179, 7
    %v181 = vadd.s32 %v180, 8
    %v182 = vld [vmem:[%s3] sm:$0x1]
    %v183 = vstv %s51
    %v184 = vmul.f32 %v183, %v182
    %v186 = vperm.slane %v184, 0
    %v188 = vadd.f32 %v161, %v186
    %v189 = vadd.f32 %v163, %v186
    %v190 = vtanh.pop %v188
    %v191 = vtanh.pop %v189
    %vm192 = vcmp.ge.s32.totalorder %v180, 0
    %vm193 = vcmp.ge.s32.totalorder %v181, 0
    %vm194 = vcmp.lt.s32.totalorder %v180, 8
    %vm195 = vcmp.lt.s32.totalorder %v181, 8
    %vm196 = vmand %vm192, %vm194
    %vm197 = vmand %vm193, %vm195
    %v198 = vsel %vm196, %v190, 0.0
    %v199 = vsel %vm197, %v191, 0.0
    %s200 = scalar_lea.vmem %s3, 1
    %v201 = vld [vmem:[%s200] sm:$0x1]
    %v202 = vmul.f32 %v183, %v201
    %v204 = vperm.slane %v202, 0
    %v206 = vadd.f32 %v175, %v204
    %v207 = vadd.f32 %v177, %v204
    %v208 = vtanh.pop %v206
    %v209 = vtanh.pop %v207
    %vm210 = vcmp.ge.s32.totalorder %v180, 8
    %vm211 = vcmp.ge.s32.totalorder %v181, 8
    %vm212 = vcmp.lt.s32.totalorder %v180, 12
    %vm213 = vcmp.lt.s32.totalorder %v181, 12
    %vm214 = vmand %vm210, %vm212
    %vm215 = vmand %vm211, %vm213
    %v216 = vsel %vm214, %v208, %v198
    %v217 = vsel %vm215, %v209, %v199
    %218 = vst [vmem:[#allocation8] sm:$0xff] %v216
    %219 = vst [vmem:[#allocation8 + $0x8] sm:$0xf] %v217
    // Predicated region
    $region26: #{_lambda_.1} parent=1 // pred_check
      _
    $region27: #{_lambda_.1} parent=1 // pred_check_branch
      %221 = sbr.rel (0) target = $region29
    $region28: #{_lambda_.1} parent=1 // pred_region
      %223 = vsyncadd [#allocation5], 0
      %s224 = sshll.u32 [#allocation8], 4
      %s225 = int_to_ptr.vmem [resolvable:$true] %s224
      %s226 = sshll.u32 %s4, 4
      %s227 = int_to_ptr.hbm [resolvable:$true] %s226
      %232 = dma.vmem_to_hbm [thread:$0]  %s225, 256, %s227, [#allocation5], 128, 128, 8
    $region29: #{_lambda_.1} parent=1 // pred_fallthru
      _
    // Predicated region
    $region30: #{_lambda_.1} parent=1 // pred_check
      _
    $region31: #{_lambda_.1} parent=1 // pred_check_branch
      %234 = sbr.rel (0) target = $region33
    $region32: #{_lambda_.1} parent=1 // pred_region
      %236 = dma.done [#allocation5], 256
    $region33: #{_lambda_.1} parent=1 // pred_fallthru
      _
    %237 = vsyncpa [#allocation4], 1
    %238 = vsyncpa [#allocation7], 1
    %239 = vsyncpa [#allocation5], 1

</llo_original>
